<compile_context>
chip_gen: v5e
topology: v5e:2x2
jax: 0.10.0
libtpu: 0.0.40
codegen_flags: <defaults>
</compile_context>

<pallas_src>
import functools

import jax
import jax.numpy as jnp
from jax.experimental import pallas as pl
from jax.experimental.pallas import tpu as pltpu

LANES = 512      # lane-dense last dim (multiple of 128)
MAX_ROWS = 512   # max sublane rows per block -> 512*512*4 B = 1 MiB f32
OUT_LANES = 128  # per-core partial-sum output block width


def _focal_pointwise(x, y, gamma, alpha):
    """Elementwise focal-modulated BCE-with-logits (f32 in, f32 out)."""
    # Shared transcendental: e = exp(-|x|) feeds both the BCE log-term and sigmoid.
    e = jnp.exp(-jnp.abs(x))
    # BCEWithLogitsLoss(reduction='none'): max(x,0) - x*y + log(1 + exp(-|x|))
    bce = jnp.maximum(x, 0.0) - x * y + jnp.log1p(e)
    # sigmoid(x):  x>=0 -> 1/(1+e) ;  x<0 -> e/(1+e)
    p = jnp.where(x >= 0.0, 1.0, e) / (1.0 + e)
    p_t = y * p + (1.0 - y) * (1.0 - p)
    alpha_factor = y * alpha + (1.0 - y) * (1.0 - alpha)
    z = 1.0 - p_t
    if gamma == 1.5:
        mod = z * jnp.sqrt(z)          # avoid generic pow (exp+log on EUP)
    elif gamma == 2.0:
        mod = z * z
    elif gamma == 1.0:
        mod = z
    elif gamma == 0.0:
        mod = jnp.ones_like(z)
    else:
        mod = z ** gamma
    return bce * alpha_factor * mod


def _focal_sum_kernel(pred_ref, true_ref, out_ref, acc_ref, *,
                      gamma, alpha, total, tiles_per_core):
    c = pl.program_id(0)   # core-parallel axis
    j = pl.program_id(1)   # reduction axis

    @pl.when(j == 0)
    def _():
        acc_ref[...] = jnp.zeros_like(acc_ref)

    x = pred_ref[...].astype(jnp.float32)
    y = true_ref[...].astype(jnp.float32)
    loss = _focal_pointwise(x, y, gamma, alpha)

    tm, lanes = acc_ref.shape
    blk = tm * lanes
    base = (c * tiles_per_core + j) * blk     # flat index of this block's start
    is_full = base + blk <= total             # block entirely inside valid data

    @pl.when(is_full)
    def _():
        acc_ref[...] += loss

    @pl.when(jnp.logical_not(is_full))
    def _():
        # Only ragged / padded / out-of-range blocks pay for the mask.
        ri = jax.lax.broadcasted_iota(jnp.int32, (tm, lanes), 0)
        ci = jax.lax.broadcasted_iota(jnp.int32, (tm, lanes), 1)
        flat = base + ri * lanes + ci
        acc_ref[...] += jnp.where(flat < total, loss, 0.0)

    @pl.when(j == pl.num_programs(1) - 1)
    def _():
        # Single cross-lane reduction per core; partial sum lands in lane 0,
        # remaining lanes are zero so the wrapper can just jnp.sum the output.
        lane = jax.lax.broadcasted_iota(jnp.int32, (1, OUT_LANES), 1)
        out_ref[...] = jnp.where(lane == 0, jnp.sum(acc_ref[...]), 0.0)


def _focal_map_kernel(pred_ref, true_ref, out_ref, *, gamma, alpha):
    out_ref[...] = _focal_pointwise(pred_ref[...].astype(jnp.float32),
                                    true_ref[...].astype(jnp.float32),
                                    gamma, alpha)


def focal_loss(pred, true, gamma=1.5, alpha=0.25, reduction="mean"):
    """Focal loss over BCE-with-logits. pred/true: same shape (e.g. NCHW)."""
    assert pred.shape == true.shape
    total = int(pred.size)
    assert 0 < total < 2 ** 31, "int32 flat indexing inside the kernel"
    gamma = float(gamma)
    alpha = float(alpha)

    # Flatten to a lane-dense 2-D slab; pad only the sub-tile tail.
    pf = pred.reshape(-1)
    tf = true.reshape(-1)
    rem = total % LANES
    if rem:
        pf = jnp.pad(pf, (0, LANES - rem))
        tf = jnp.pad(tf, (0, LANES - rem))
    rows = pf.size // LANES
    pred2d = pf.reshape(rows, LANES)
    true2d = tf.reshape(rows, LANES)

    tm = rows if rows <= MAX_ROWS else MAX_ROWS   # full-extent block if small
    n_tiles = pl.cdiv(rows, tm)

    bytes_in = total * (pred.dtype.itemsize + true.dtype.itemsize)
    cost = pl.CostEstimate(flops=18 * total, transcendentals=3 * total,
                           bytes_accessed=bytes_in + 4 * total)

    if reduction == "none":
        out2d = pl.pallas_call(
            functools.partial(_focal_map_kernel, gamma=gamma, alpha=alpha),
            out_shape=jax.ShapeDtypeStruct((rows, LANES), jnp.float32),
            grid_spec=pltpu.PrefetchScalarGridSpec(
                num_scalar_prefetch=0,
                grid=(n_tiles,),
                in_specs=[pl.BlockSpec((tm, LANES), lambda i: (i, 0)),
                          pl.BlockSpec((tm, LANES), lambda i: (i, 0))],
                out_specs=pl.BlockSpec((tm, LANES), lambda i: (i, 0))),
            compiler_params=pltpu.CompilerParams(
                dimension_semantics=("parallel",)),
            cost_estimate=cost,
        )(pred2d, true2d)
        return out2d.reshape(-1)[:total].reshape(pred.shape)

    if reduction not in ("mean", "sum"):
        raise ValueError(f"unknown reduction: {reduction!r}")

    # Split tiles across (up to) 2 TensorCores; inner axis is the reduction.
    n_cores = 2 if n_tiles >= 2 else 1
    tiles_per_core = pl.cdiv(n_tiles, n_cores)

    def in_map(c, j):
        # Clamp so out-of-range tiles (odd n_tiles) re-read a valid block; their
        # contribution is fully masked to zero inside the kernel.
        return (jnp.minimum(c * tiles_per_core + j, n_tiles - 1), 0)

    partials = pl.pallas_call(
        functools.partial(_focal_sum_kernel, gamma=gamma, alpha=alpha,
                          total=total, tiles_per_core=tiles_per_core),
        out_shape=jax.ShapeDtypeStruct((1, n_cores * OUT_LANES), jnp.float32),
        grid_spec=pltpu.PrefetchScalarGridSpec(
            num_scalar_prefetch=0,
            grid=(n_cores, tiles_per_core),
            in_specs=[pl.BlockSpec((tm, LANES), in_map),
                      pl.BlockSpec((tm, LANES), in_map)],
            out_specs=pl.BlockSpec((1, OUT_LANES), lambda c, j: (0, c)),
            scratch_shapes=[pltpu.VMEM((tm, LANES), jnp.float32)]),
        compiler_params=pltpu.CompilerParams(
            dimension_semantics=("parallel", "arbitrary")),
        cost_estimate=cost,
    )(pred2d, true2d)

    s = jnp.sum(partials)          # non-lane-0 entries are zero
    if reduction == "mean":
        return s / float(total)
    return s


def _focal_loss_ref(pred, true, gamma=1.5, alpha=0.25, reduction="mean"):
    x = pred.astype(jnp.float32)
    y = true.astype(jnp.float32)
    bce = jnp.maximum(x, 0.0) - x * y + jnp.log1p(jnp.exp(-jnp.abs(x)))
    p = jax.nn.sigmoid(x)
    p_t = y * p + (1 - y) * (1 - p)
    af = y * alpha + (1 - y) * (1 - alpha)
    mf = (1.0 - p_t) ** gamma
    loss = bce * af * mf
    if reduction == "mean":
        return jnp.mean(loss)
    if reduction == "sum":
        return jnp.sum(loss)
    return loss


if __name__ == "__main__":
    key = jax.random.PRNGKey(0)
    k1, k2 = jax.random.split(key)

    # NCHW, small shapes: batch=2, channels=4, spatial=16x16
    shape = (2, 4, 16, 16)
    pred = jax.random.normal(k1, shape, dtype=jnp.float32)
    true = (jax.random.uniform(k2, shape) > 0.5).astype(jnp.float32)

    out = jax.block_until_ready(
        focal_loss(pred, true, gamma=1.5, alpha=0.25, reduction="mean"))
    ref = _focal_loss_ref(pred, true, 1.5, 0.25, "mean")
    assert jnp.allclose(out, ref, rtol=1e-5, atol=1e-6), (out, ref)

    # reduction='none' path (elementwise kernel)
    out_n = jax.block_until_ready(focal_loss(pred, true, reduction="none"))
    ref_n = _focal_loss_ref(pred, true, 1.5, 0.25, "none")
    assert out_n.shape == shape
    assert jnp.allclose(out_n, ref_n, rtol=1e-5, atol=1e-6)

    # Ragged tail (total not a multiple of LANES) exercises the mask path.
    shape2 = (2, 3, 7, 11)
    p2 = jax.random.normal(k1, shape2, dtype=jnp.float32)
    t2 = (jax.random.uniform(k2, shape2) > 0.5).astype(jnp.float32)
    o2 = jax.block_until_ready(focal_loss(p2, t2, reduction="sum"))
    r2 = _focal_loss_ref(p2, t2, 1.5, 0.25, "sum")
    assert jnp.allclose(o2, r2, rtol=1e-5, atol=1e-5), (o2, r2)

    print("KERNEL_OK")
</pallas_src>

<mosaic_0001>
module attributes {stable_mosaic.version = 11 : i64} {
  func.func @_focal_sum_kernel(%arg0: i32, %arg1: i32, %arg2: memref<4x512xf32, #tpu.memory_space<vmem>>, %arg3: memref<4x512xf32, #tpu.memory_space<vmem>>, %arg4: memref<1x128xf32, #tpu.memory_space<vmem>>, %arg5: memref<4x512xf32, #tpu.memory_space<vmem>>) attributes {dimension_semantics = [#tpu.dimension_semantics<parallel>, #tpu.dimension_semantics<arbitrary>], iteration_bounds = array<i64: 1, 1>, scalar_prefetch = 0 : i64, scratch_operands = 1 : i64, tpu.core_type = #tpu.core_type<tc>, window_params = [{transform_indices = @transform_0, window_bounds = array<i64: 4, 512>}, {transform_indices = @transform_1, window_bounds = array<i64: 4, 512>}, {transform_indices = @transform_2, window_bounds = array<i64: 1, 128>}]} {
    %c0_i32 = arith.constant 0 : i32
    %0 = arith.cmpi eq, %arg1, %c0_i32 : i32
    %1 = arith.extui %0 : i1 to i32
    %c0_i32_0 = arith.constant 0 : i32
    %2 = arith.cmpi ne, %1, %c0_i32_0 : i32
    scf.if %2 {
      %cst_20 = arith.constant 0.000000e+00 : f32
      %55 = vector.broadcast %cst_20 : f32 to vector<4x512xf32>
      %c0_21 = arith.constant 0 : index
      %c0_22 = arith.constant 0 : index
      %56 = vector.load %arg5[%c0_21, %c0_22] : memref<4x512xf32, #tpu.memory_space<vmem>>, vector<4x512xf32>
      tpu.vector_store %arg5[%c0_21, %c0_22], %55 {strides = array<i32>} : memref<4x512xf32, #tpu.memory_space<vmem>>, vector<4x512xf32>,
    } else {
    }
    %c0 = arith.constant 0 : index
    %c0_1 = arith.constant 0 : index
    %3 = vector.load %arg2[%c0, %c0_1] : memref<4x512xf32, #tpu.memory_space<vmem>>, vector<4x512xf32>
    %c0_2 = arith.constant 0 : index
    %c0_3 = arith.constant 0 : index
    %4 = vector.load %arg3[%c0_2, %c0_3] : memref<4x512xf32, #tpu.memory_space<vmem>>, vector<4x512xf32>
    %5 = math.absf %3 : vector<4x512xf32>
    %cst = arith.constant 0.000000e+00 : f32
    %6 = vector.broadcast %cst : f32 to vector<4x512xf32>
    %7 = arith.subf %6, %5 : vector<4x512xf32>
    %8 = math.exp %7 : vector<4x512xf32>
    %cst_4 = arith.constant 0.000000e+00 : f32
    %9 = vector.broadcast %cst_4 : f32 to vector<4x512xf32>
    %10 = arith.maximumf %3, %9 : vector<4x512xf32>
    %11 = arith.mulf %3, %4 : vector<4x512xf32>
    %12 = arith.subf %10, %11 : vector<4x512xf32>
    %13 = math.log1p %8 : vector<4x512xf32>
    %14 = arith.addf %12, %13 : vector<4x512xf32>
    %cst_5 = arith.constant 0.000000e+00 : f32
    %15 = vector.broadcast %cst_5 : f32 to vector<4x512xf32>
    %16 = arith.cmpf oge, %3, %15 : vector<4x512xf32>
    %cst_6 = arith.constant 1.000000e+00 : f32
    %17 = vector.broadcast %cst_6 : f32 to vector<4x512xf32>
    %18 = arith.select %16, %17, %8 : vector<4x512xi1>, vector<4x512xf32>
    %cst_7 = arith.constant 1.000000e+00 : f32
    %19 = vector.broadcast %cst_7 : f32 to vector<4x512xf32>
    %20 = arith.addf %19, %8 : vector<4x512xf32>
    %21 = arith.divf %18, %20 : vector<4x512xf32>
    %22 = arith.mulf %4, %21 : vector<4x512xf32>
    %cst_8 = arith.constant 1.000000e+00 : f32
    %23 = vector.broadcast %cst_8 : f32 to vector<4x512xf32>
    %24 = arith.subf %23, %4 : vector<4x512xf32>
    %cst_9 = arith.constant 1.000000e+00 : f32
    %25 = vector.broadcast %cst_9 : f32 to vector<4x512xf32>
    %26 = arith.subf %25, %21 : vector<4x512xf32>
    %27 = arith.mulf %24, %26 : vector<4x512xf32>
    %28 = arith.addf %22, %27 : vector<4x512xf32>
    %cst_10 = arith.constant 2.500000e-01 : f32
    %29 = vector.broadcast %cst_10 : f32 to vector<4x512xf32>
    %30 = arith.mulf %4, %29 : vector<4x512xf32>
    %cst_11 = arith.constant 1.000000e+00 : f32
    %31 = vector.broadcast %cst_11 : f32 to vector<4x512xf32>
    %32 = arith.subf %31, %4 : vector<4x512xf32>
    %cst_12 = arith.constant 7.500000e-01 : f32
    %33 = vector.broadcast %cst_12 : f32 to vector<4x512xf32>
    %34 = arith.mulf %32, %33 : vector<4x512xf32>
    %35 = arith.addf %30, %34 : vector<4x512xf32>
    %cst_13 = arith.constant 1.000000e+00 : f32
    %36 = vector.broadcast %cst_13 : f32 to vector<4x512xf32>
    %37 = arith.subf %36, %28 : vector<4x512xf32>
    %38 = math.sqrt %37 : vector<4x512xf32>
    %39 = arith.mulf %37, %38 : vector<4x512xf32>
    %40 = arith.mulf %14, %35 : vector<4x512xf32>
    %41 = arith.mulf %40, %39 : vector<4x512xf32>
    %c1_i32 = arith.constant 1 : i32
    %42 = arith.muli %arg0, %c1_i32 : i32
    %43 = arith.addi %42, %arg1 : i32
    %c2048_i32 = arith.constant 2048 : i32
    %44 = arith.muli %43, %c2048_i32 : i32
    %c2048_i32_14 = arith.constant 2048 : i32
    %45 = arith.addi %44, %c2048_i32_14 : i32
    %c2048_i32_15 = arith.constant 2048 : i32
    %46 = arith.cmpi sle, %45, %c2048_i32_15 : i32
    %47 = arith.extui %46 : i1 to i32
    %c0_i32_16 = arith.constant 0 : i32
    %48 = arith.cmpi ne, %47, %c0_i32_16 : i32
    scf.if %48 {
      %c0_20 = arith.constant 0 : index
      %c0_21 = arith.constant 0 : index
      %55 = vector.load %arg5[%c0_20, %c0_21] : memref<4x512xf32, #tpu.memory_space<vmem>>, vector<4x512xf32>
      %56 = arith.addf %55, %41 : vector<4x512xf32>
      %c0_22 = arith.constant 0 : index
      %c0_23 = arith.constant 0 : index
      %57 = vector.load %arg5[%c0_22, %c0_23] : memref<4x512xf32, #tpu.memory_space<vmem>>, vector<4x512xf32>
      tpu.vector_store %arg5[%c0_22, %c0_23], %56 {strides = array<i32>} : memref<4x512xf32, #tpu.memory_space<vmem>>, vector<4x512xf32>,
    } else {
    }
    %true = arith.constant true
    %49 = arith.xori %46, %true : i1
    %50 = arith.extui %49 : i1 to i32
    %c0_i32_17 = arith.constant 0 : i32
    %51 = arith.cmpi ne, %50, %c0_i32_17 : i32
    scf.if %51 {
      %55 = tpu.iota {dimensions = array<i32: 0>} : vector<4x512xi32>
      %56 = tpu.iota {dimensions = array<i32: 1>} : vector<4x512xi32>
      %c512_i32 = arith.constant 512 : i32
      %57 = vector.broadcast %c512_i32 : i32 to vector<4x512xi32>
      %58 = arith.muli %55, %57 : vector<4x512xi32>
      %59 = vector.broadcast %44 : i32 to vector<4x512xi32>
      %60 = arith.addi %59, %58 : vector<4x512xi32>
      %61 = arith.addi %60, %56 : vector<4x512xi32>
      %c0_20 = arith.constant 0 : index
      %c0_21 = arith.constant 0 : index
      %62 = vector.load %arg5[%c0_20, %c0_21] : memref<4x512xf32, #tpu.memory_space<vmem>>, vector<4x512xf32>
      %c2048_i32_22 = arith.constant 2048 : i32
      %63 = vector.broadcast %c2048_i32_22 : i32 to vector<4x512xi32>
      %64 = arith.cmpi slt, %61, %63 : vector<4x512xi32>
      %cst_23 = arith.constant 0.000000e+00 : f32
      %65 = vector.broadcast %cst_23 : f32 to vector<4x512xf32>
      %66 = arith.select %64, %41, %65 : vector<4x512xi1>, vector<4x512xf32>
      %67 = arith.addf %62, %66 : vector<4x512xf32>
      %c0_24 = arith.constant 0 : index
      %c0_25 = arith.constant 0 : index
      %68 = vector.load %arg5[%c0_24, %c0_25] : memref<4x512xf32, #tpu.memory_space<vmem>>, vector<4x512xf32>
      tpu.vector_store %arg5[%c0_24, %c0_25], %67 {strides = array<i32>} : memref<4x512xf32, #tpu.memory_space<vmem>>, vector<4x512xf32>,
    } else {
    }
    %c0_i32_18 = arith.constant 0 : i32
    %52 = arith.cmpi eq, %arg1, %c0_i32_18 : i32
    %53 = arith.extui %52 : i1 to i32
    %c0_i32_19 = arith.constant 0 : i32
    %54 = arith.cmpi ne, %53, %c0_i32_19 : i32
    scf.if %54 {
      %55 = tpu.iota {dimensions = array<i32: 1>} : vector<1x128xi32>
      %c0_i32_20 = arith.constant 0 : i32
      %56 = vector.broadcast %c0_i32_20 : i32 to vector<1x128xi32>
      %57 = arith.cmpi eq, %55, %56 : vector<1x128xi32>
      %c0_21 = arith.constant 0 : index
      %c0_22 = arith.constant 0 : index
      %58 = vector.load %arg5[%c0_21, %c0_22] : memref<4x512xf32, #tpu.memory_space<vmem>>, vector<4x512xf32>
      %59 = vector.shape_cast %58 : vector<4x512xf32> to vector<1x4x512xf32>
      %cst_23 = arith.constant dense<0.000000e+00> : vector<1xf32>
      %60 = vector.multi_reduction <add>, %59, %cst_23 [1, 2] : vector<1x4x512xf32> to vector<1xf32>
      %61 = vector.shape_cast %60 : vector<1xf32> to vector<1x1x1xf32>
      %62 = vector.extract %61[0, 0, 0] : f32 from vector<1x1x1xf32>
      %cst_24 = arith.constant 0.000000e+00 : f32
      %63 = vector.broadcast %62 : f32 to vector<1x128xf32>
      %64 = vector.broadcast %cst_24 : f32 to vector<1x128xf32>
      %65 = arith.select %57, %63, %64 : vector<1x128xi1>, vector<1x128xf32>
      %c0_25 = arith.constant 0 : index
      %c0_26 = arith.constant 0 : index
      %66 = vector.load %arg4[%c0_25, %c0_26] : memref<1x128xf32, #tpu.memory_space<vmem>>, vector<1x128xf32>
      tpu.vector_store %arg4[%c0_25, %c0_26], %65 {strides = array<i32>} : memref<1x128xf32, #tpu.memory_space<vmem>>, vector<1x128xf32>,
    } else {
    }
    return
  }
  func.func @transform_0(%arg0: i32, %arg1: i32) -> (i32, i32) {
    %c1_i32 = arith.constant 1 : i32
    %0 = arith.muli %arg0, %c1_i32 : i32
    %1 = arith.addi %0, %arg1 : i32
    %c0_i32 = arith.constant 0 : i32
    %2 = arith.minsi %1, %c0_i32 : i32
    %c0_i32_0 = arith.constant 0 : i32
    %c0_i32_1 = arith.constant 0 : i32
    return %2, %c0_i32_0 : i32, i32
  }
  func.func @transform_1(%arg0: i32, %arg1: i32) -> (i32, i32) {
    %c1_i32 = arith.constant 1 : i32
    %0 = arith.muli %arg0, %c1_i32 : i32
    %1 = arith.addi %0, %arg1 : i32
    %c0_i32 = arith.constant 0 : i32
    %2 = arith.minsi %1, %c0_i32 : i32
    %c0_i32_0 = arith.constant 0 : i32
    %c0_i32_1 = arith.constant 0 : i32
    return %2, %c0_i32_0 : i32, i32
  }
  func.func @transform_2(%arg0: i32, %arg1: i32) -> (i32, i32) {
    %c0_i32 = arith.constant 0 : i32
    %c0_i32_0 = arith.constant 0 : i32
    return %c0_i32, %arg0 : i32, i32
  }
}

</mosaic_0001>

<llo_original>
// kernel: tpu_custom_call.1
$region0: #{tpu_custom_call.1}
  #allocation0 [shape = 'u32[]', space=smem, size = 0x4, offset = 0x4, fixed_abs, tag = 'smem constant byte address 0x4 - core index']
  #allocation1 [shape = 'u32[72,128]{1,0:T(1,128)}', space=vmem, size = 0x9000, scoped, tag = 'internal scratch']
  #allocation2 [shape = 'f32[4,512]{1,0:T(4,128)}', space=vmem, size = 0x2000, scoped, tag = 'scratch operand']
  %s0 = inlined_call_operand.hbm [shape: f32[4,512], index: 0, kind: input, shape index: {}]
  %s1 = inlined_call_operand.hbm [shape: f32[4,512], index: 1, kind: input, shape index: {}]
  %s2 = inlined_call_operand.hbm [shape: f32[1,128], index: 2, kind: output, shape index: {}]
  %s3 = sld [smem:[#allocation0]]
  $region42: #{tpu_custom_call.1} parent=0
    _
  %s5 = ssub.s32 1, %s3
  %s6 = scalar_select 0, %s5, %s3
  $region1: #{tpu_custom_call.1} parent=0
    #allocation3 [shape = 'u8[8192]{0}', space=vmem, size = 0x2000, scoped, tag = 'input window, operand 0, single buffered']
    #allocation4 [shape = 's32[1]{0}', space=sflag, size = 0x4, scoped, tag = 'scoped memory for tpu_custom_call.1']
    #allocation5 [shape = 's32[1]{0}', space=sflag, size = 0x4, scoped, tag = 'scoped memory for tpu_custom_call.1']
    #allocation6 [shape = 'u8[8192]{0}', space=vmem, size = 0x2000, scoped, tag = 'input window, operand 1, single buffered']
    #allocation7 [shape = 's32[1]{0}', space=sflag, size = 0x4, scoped, tag = 'scoped memory for tpu_custom_call.1']
    #allocation8 [shape = 'u8[512]{0}', space=vmem, size = 0x400, scoped, tag = 'output window, operand 0, single buffered']
    %7 = vsyncpa [#allocation4], 0
    %8 = vsyncpa [#allocation7], 0
    %9 = vsyncpa [#allocation5], 0
    // Predicated region
    $region2: #{tpu_custom_call.1} parent=1 // pred_check
      _
    $region3: #{tpu_custom_call.1} parent=1 // pred_check_branch
      %11 = sbr.rel (0) target = $region5
    $region4: #{tpu_custom_call.1} parent=1 // pred_region
      %s12 = sadd.s32 0, 0
      %p13 = scmp.lt.s32.totalorder %s12, 0
      %s14 = scalar_select %p13, %s12, 0
      %16 = vsyncadd [#allocation4], 0
      %s17 = smul.addr %s14, 4
      %s18 = smul.addr %s17, 4
      %s19 = scalar_lea.hbm %s0, %s18
      %s21 = sshll.u32 %s19, 4
      %s22 = int_to_ptr.hbm [resolvable:$true] %s21
      %s23 = sshll.u32 [#allocation3], 4
      %s24 = int_to_ptr.vmem [resolvable:$true] %s23
      %26 = dma.hbm_to_vmem [thread:$0]  %s22, 256, %s24, [#allocation4]
    $region5: #{tpu_custom_call.1} parent=1 // pred_fallthru
      _
    // Predicated region
    $region6: #{tpu_custom_call.1} parent=1 // pred_check
      _
    $region7: #{tpu_custom_call.1} parent=1 // pred_check_branch
      %28 = sbr.rel (0) target = $region9
    $region8: #{tpu_custom_call.1} parent=1 // pred_region
      %s29 = sadd.s32 0, 0
      %p30 = scmp.lt.s32.totalorder %s29, 0
      %s31 = scalar_select %p30, %s29, 0
      %33 = vsyncadd [#allocation7], 0
      %s34 = smul.addr %s31, 4
      %s35 = smul.addr %s34, 4
      %s36 = scalar_lea.hbm %s1, %s35
      %s38 = sshll.u32 %s36, 4
      %s39 = int_to_ptr.hbm [resolvable:$true] %s38
      %s40 = sshll.u32 [#allocation6], 4
      %s41 = int_to_ptr.vmem [resolvable:$true] %s40
      %43 = dma.hbm_to_vmem [thread:$0]  %s39, 256, %s41, [#allocation7]
    $region9: #{tpu_custom_call.1} parent=1 // pred_fallthru
      _
    // Predicated region
    $region10: #{tpu_custom_call.1} parent=1 // pred_check
      _
    $region11: #{tpu_custom_call.1} parent=1 // pred_check_branch
      %45 = sbr.rel (0) target = $region13
    $region12: #{tpu_custom_call.1} parent=1 // pred_region
      %47 = dma.done [#allocation4], 256
    $region13: #{tpu_custom_call.1} parent=1 // pred_fallthru
      _
    // Predicated region
    $region14: #{tpu_custom_call.1} parent=1 // pred_check
      _
    $region15: #{tpu_custom_call.1} parent=1 // pred_check_branch
      %49 = sbr.rel (0) target = $region17
    $region16: #{tpu_custom_call.1} parent=1 // pred_region
      %51 = dma.done [#allocation7], 256
    $region17: #{tpu_custom_call.1} parent=1 // pred_fallthru
      _
    %s52 = sadd.s32 0, 0
    %p53 = scmp.lt.s32.totalorder %s52, 0
    %s54 = scalar_select %p53, %s52, 0
    %s55 = sadd.s32 0, 0
    %p56 = scmp.lt.s32.totalorder %s55, 0
    %s57 = scalar_select %p56, %s55, 0
    %p58 = scmp.eq.s32.totalorder 0, 0
    // Predicated region
    $region18: #{tpu_custom_call.1} parent=1 // pred_check
      %p59 = pneg %p58
    $region19: #{tpu_custom_call.1} parent=1 // pred_check_branch
      %61 = sbr.rel (%p59) target = $region21
    $region20: #{tpu_custom_call.1} parent=1 // pred_region
      %62 = vst [vmem:[#allocation2] sm:$0xff] 0.0
      %63 = vst [vmem:[#allocation2 + $0x8] sm:$0xff] 0.0
    $region21: #{tpu_custom_call.1} parent=1 // pred_fallthru
      _
    %v64 = vld [vmem:[#allocation3] sm:$0xff]
    %v65 = vld [vmem:[#allocation3 + $0x8] sm:$0xff]
    %v66 = vld [vmem:[#allocation6] sm:$0xff]
    %v67 = vld [vmem:[#allocation6 + $0x8] sm:$0xff]
    %v68 = vand.u32 2147483647, %v64
    %v69 = vand.u32 2147483647, %v65
    %v70 = vsub.f32 0.0, %v68
    %v71 = vsub.f32 0.0, %v69
    %v72 = vmul.f32 %v70, 1.442695
    %v73 = vpow.pop %v72
    %v74 = vmul.f32 %v71, 1.442695
    %v75 = vpow.pop %v74
    %v76 = vmax.f32 %v64, 0.0
    %v77 = vmax.f32 %v65, 0.0
    %v78 = vmul.f32 %v64, %v66
    %v79 = vmul.f32 %v65, %v67
    %v80 = vsub.f32 %v76, %v78
    %v81 = vsub.f32 %v77, %v79
    %v82 = vadd.f32 %v73, 1.0
    %v83 = vlog2.pop %v82
    %v84 = vmul.f32 %v83, 0.6931472
    %v85 = vmul.f32 -0.5, %v73
    %v86 = vadd.f32 %v85, 1.0
    %v87 = vmul.f32 %v86, %v73
    %v88 = vand.u32 2147483647, %v73
    %vm89 = vcmp.lt.f32.partialorder %v88, 0.0004427343
    %v90 = vsel %vm89, %v87, %v84
    %v91 = vadd.f32 %v75, 1.0
    %v92 = vlog2.pop %v91
    %v93 = vmul.f32 %v92, 0.6931472
    %v94 = vmul.f32 -0.5, %v75
    %v95 = vadd.f32 %v94, 1.0
    %v96 = vmul.f32 %v95, %v75
    %v97 = vand.u32 2147483647, %v75
    %vm98 = vcmp.lt.f32.partialorder %v97, 0.0004427343
    %v99 = vsel %vm98, %v96, %v93
    %v100 = vadd.f32 %v80, %v90
    %v101 = vadd.f32 %v81, %v99
    %vm102 = vcmp.ge.f32.partialorder %v64, 0.0
    %vm103 = vcmp.ge.f32.partialorder %v65, 0.0
    %v104 = vsel %vm102, 1.0, %v73
    %v105 = vsel %vm103, 1.0, %v75
    %v106 = vadd.f32 %v73, 1.0
    %v107 = vadd.f32 %v75, 1.0
    %v108 = vrcp.pop %v106
    %v109 = vmul.f32 %v106, %v108
    %v110 = vsub.f32 1.0, %v109
    %v111 = vmul.f32 %v108, %v110
    %v112 = vadd.f32 %v108, %v111
    %vm113 = vweird.f32 %v106
    %vm114 = vweird.f32 %v108
    %vm115 = vmor %vm113, %vm114
    %v116 = vsel %vm115, %v108, %v112
    %v117 = vand.u32 2147483647, %v106
    %vm118 = vcmp.eq.f32.partialorder %v117, 8.507059e+37
    %v119 = vand.u32 %v106, 2147483648
    %v120 = vor.u32 1.1754944e-38, %v119
    %v121 = vsel %vm118, %v120, %v116
    %v122 = vmul.f32 %v104, %v121
    %v123 = vrcp.pop %v107
    %v124 = vmul.f32 %v107, %v123
    %v125 = vsub.f32 1.0, %v124
    %v126 = vmul.f32 %v123, %v125
    %v127 = vadd.f32 %v123, %v126
    %vm128 = vweird.f32 %v107
    %vm129 = vweird.f32 %v123
    %vm130 = vmor %vm128, %vm129
    %v131 = vsel %vm130, %v123, %v127
    %v132 = vand.u32 2147483647, %v107
    %vm133 = vcmp.eq.f32.partialorder %v132, 8.507059e+37
    %v134 = vand.u32 %v107, 2147483648
    %v135 = vor.u32 1.1754944e-38, %v134
    %v136 = vsel %vm133, %v135, %v131
    %v137 = vmul.f32 %v105, %v136
    %v138 = vmul.f32 %v66, %v122
    %v139 = vmul.f32 %v67, %v137
    %v140 = vsub.f32 1.0, %v66
    %v141 = vsub.f32 1.0, %v67
    %v142 = vsub.f32 1.0, %v122
    %v143 = vsub.f32 1.0, %v137
    %v144 = vmul.f32 %v140, %v142
    %v145 = vmul.f32 %v141, %v143
    %v146 = vadd.f32 %v138, %v144
    %v147 = vadd.f32 %v139, %v145
    %v148 = vmul.f32 %v66, 0.25
    %v149 = vmul.f32 %v67, 0.25
    %v150 = vmul.f32 %v140, 0.75
    %v151 = vmul.f32 %v141, 0.75
    %v152 = vadd.f32 %v148, %v150
    %v153 = vadd.f32 %v149, %v151
    %v154 = vsub.f32 1.0, %v146
    %v155 = vsub.f32 1.0, %v147
    %v156 = vrsqrt.pop %v154
    %v157 = vmul.f32 %v156, %v154
    %v158 = vmul.f32 %v157, %v156
    %v159 = vmul.f32 0.5, %v158
    %v160 = vsub.f32 1.5, %v159
    %v161 = vmul.f32 %v156, %v160
    %v162 = vmul.f32 %v154, %v161
    %vm163 = vcmp.eq.f32.partialorder %v154, inf
    %v164 = vsel %vm163, %v154, %v162
    %vm165 = vcmp.eq.f32.partialorder %v154, 0.0
    %v166 = vand.u32 %v154, 2147483648
    %v167 = vsel %vm165, %v166, %v164
    %v168 = vrsqrt.pop %v155
    %v169 = vmul.f32 %v168, %v155
    %v170 = vmul.f32 %v169, %v168
    %v171 = vmul.f32 0.5, %v170
    %v172 = vsub.f32 1.5, %v171
    %v173 = vmul.f32 %v168, %v172
    %v174 = vmul.f32 %v155, %v173
    %vm175 = vcmp.eq.f32.partialorder %v155, inf
    %v176 = vsel %vm175, %v155, %v174
    %vm177 = vcmp.eq.f32.partialorder %v155, 0.0
    %v178 = vand.u32 %v155, 2147483648
    %v179 = vsel %vm177, %v178, %v176
    %v180 = vmul.f32 %v154, %v167
    %v181 = vmul.f32 %v155, %v179
    %v182 = vmul.f32 %v100, %v152
    %v183 = vmul.f32 %v101, %v153
    %v184 = vmul.f32 %v182, %v180
    %v185 = vmul.f32 %v183, %v181
    %s186 = sadd.s32 0, 0
    %s187 = smul.u32 %s186, 2048
    %s188 = sadd.s32 %s187, 2048
    %p189 = scmp.le.s32.totalorder %s188, 2048
    // Predicated region
    $region22: #{tpu_custom_call.1} parent=1 // pred_check
      %p190 = pneg %p189
    $region23: #{tpu_custom_call.1} parent=1 // pred_check_branch
      %192 = sbr.rel (%p190) target = $region25
    $region24: #{tpu_custom_call.1} parent=1 // pred_region
      %v193 = vld [vmem:[#allocation2] sm:$0xff]
      %v194 = vld [vmem:[#allocation2 + $0x8] sm:$0xff]
      %v195 = vadd.f32 %v193, %v184
      %v196 = vadd.f32 %v194, %v185
      %197 = vst [vmem:[#allocation2] sm:$0xff] %v195
      %198 = vst [vmem:[#allocation2 + $0x8] sm:$0xff] %v196
    $region25: #{tpu_custom_call.1} parent=1 // pred_fallthru
      _
    %p199 = scmp.gt.s32.totalorder %s188, 2048
    // Predicated region
    $region26: #{tpu_custom_call.1} parent=1 // pred_check
      %p200 = pneg %p199
    $region27: #{tpu_custom_call.1} parent=1 // pred_check_branch
      %202 = sbr.rel (%p200) target = $region29
    $region28: #{tpu_custom_call.1} parent=1 // pred_region
      %v203 = vlaneseq
      %v204 = vshrl.u32 %v203, 7
      %v205 = vlaneseq
      %v206 = vand.u32 %v205, 127
      %v207 = vadd.s32 %v206, 128
      %v208 = vadd.s32 %v206, 256
      %v209 = vadd.s32 %v206, 384
      %v210 = vmul.u32 %v204, 512
      %v211 = vstv %s187
      %v212 = vadd.s32 %v211, %v210
      %v213 = vadd.s32 %v212, %v206
      %v214 = vadd.s32 %v212, %v207
      %v215 = vadd.s32 %v212, %v208
      %v216 = vadd.s32 %v212, %v209
      %v217 = vld [vmem:[#allocation2] sm:$0xff]
      %v218 = vld [vmem:[#allocation2 + $0x8] sm:$0xff]
      %vm219 = vcmp.lt.s32.totalorder %v213, 2048
      %vm220 = vcmp.lt.s32.totalorder %v214, 2048
      %vm221 = vcmp.lt.s32.totalorder %v215, 2048
      %vm222 = vcmp.lt.s32.totalorder %v216, 2048
      %225 = vst [vmem:[#allocation1] ss:$2 sm:$0xff] %v184
      %s226 = scalar_lea.vmem [#allocation1], 16
      %227 = vst [vmem:[%s226] ss:$2 sm:$0xff] %v185
      %v228 = vld.sshfl [vmem:[#allocation1] sm:$0xff pattern:$0x75316420]
      %v229 = vld.sshfl [vmem:[#allocation1 + $0x8] sm:$0xff pattern:$0x75316420]
      %v230 = vld.sshfl [vmem:[#allocation1 + $0x10] sm:$0xff pattern:$0x75316420]
      %v231 = vld.sshfl [vmem:[#allocation1 + $0x18] sm:$0xff pattern:$0x75316420]
      %v236 = vsel %vm219, %v228, 0.0
      %v237 = vsel %vm220, %v229, 0.0
      %v238 = vsel %vm221, %v230, 0.0
      %v239 = vsel %vm222, %v231, 0.0
      %v244 = vrot.slane %v237, 4
      %v245 = vrot.slane %v239, 4
      %vm246 = vcmask 1043456
      %v247 = vsel %vm246, %v236, %v244
      %v248 = vsel %vm246, %v238, %v245
      %v251 = vadd.f32 %v217, %v247
      %v252 = vadd.f32 %v218, %v248
      %253 = vst [vmem:[#allocation2] sm:$0xff] %v251
      %254 = vst [vmem:[#allocation2 + $0x8] sm:$0xff] %v252
    $region29: #{tpu_custom_call.1} parent=1 // pred_fallthru
      _
    // Predicated region
    $region30: #{tpu_custom_call.1} parent=1 // pred_check
      %p255 = pneg %p58
    $region31: #{tpu_custom_call.1} parent=1 // pred_check_branch
      %257 = sbr.rel (%p255) target = $region33
    $region32: #{tpu_custom_call.1} parent=1 // pred_region
      %v258 = vlaneseq
      %v259 = vand.u32 %v258, 127
      %vm260 = vcmp.eq.s32.totalorder %v259, 0
      %v261 = vld [vmem:[#allocation2] sm:$0xff]
      %v262 = vld [vmem:[#allocation2 + $0x8] sm:$0xff]
      %265 = vst [vmem:[#allocation1] ss:$2 sm:$0xff] %v261
      %s266 = scalar_lea.vmem [#allocation1], 16
      %267 = vst [vmem:[%s266] ss:$2 sm:$0xff] %v262
      %v268 = vld.sshfl [vmem:[#allocation1] sm:$0xff pattern:$0x75316420]
      %v269 = vld.sshfl [vmem:[#allocation1 + $0x8] sm:$0xff pattern:$0x75316420]
      %v270 = vld.sshfl [vmem:[#allocation1 + $0x10] sm:$0xff pattern:$0x75316420]
      %v271 = vld.sshfl [vmem:[#allocation1 + $0x18] sm:$0xff pattern:$0x75316420]
      %vm276 = vcmask 1043456
      %v277 = vsel %vm276, %v268, 0.0
      %v278 = vsel %vm276, %v269, 0.0
      %v279 = vadd.f32 %v277, %v278
      %v280 = vsel %vm276, %v270, 0.0
      %v281 = vadd.f32 %v279, %v280
      %v282 = vsel %vm276, %v271, 0.0
      %v283 = vadd.f32 %v281, %v282
      %284 = vadd.xlane.f32.xlu0 %v283
      %v285 = vpop.xlane.xlu0 %284
      %v286 = vrot.slane %v285, 4
      %v287 = vadd.f32 %v285, %v286
      %v288 = vrot.slane %v287, 2
      %v289 = vadd.f32 %v287, %v288
      %v290 = vrot.slane %v289, 1
      %v291 = vadd.f32 %v289, %v290
      %s292 = vtos %v291
      %v293 = vstv %s292
      %v294 = vsel %vm260, %v293, 0.0
      %295 = vst [vmem:[#allocation8] sm:$0x1] %v294
    $region33: #{tpu_custom_call.1} parent=1 // pred_fallthru
      _
    // Predicated region
    $region34: #{tpu_custom_call.1} parent=1 // pred_check
      _
    $region35: #{tpu_custom_call.1} parent=1 // pred_check_branch
      %297 = sbr.rel (0) target = $region37
    $region36: #{tpu_custom_call.1} parent=1 // pred_region
      %299 = vsyncadd [#allocation5], 0
      %s301 = sshll.u32 [#allocation8], 4
      %s302 = int_to_ptr.vmem [resolvable:$true] %s301
      %s303 = sshll.u32 %s2, 4
      %s304 = int_to_ptr.hbm [resolvable:$true] %s303
      %306 = dma.vmem_to_hbm [thread:$0]  %s302, 16, %s304, [#allocation5]
    $region37: #{tpu_custom_call.1} parent=1 // pred_fallthru
      _
    // Predicated region
    $region38: #{tpu_custom_call.1} parent=1 // pred_check
      _
    $region39: #{tpu_custom_call.1} parent=1 // pred_check_branch
      %308 = sbr.rel (0) target = $region41
    $region40: #{tpu_custom_call.1} parent=1 // pred_region
      %310 = dma.done [#allocation5], 16
    $region41: #{tpu_custom_call.1} parent=1 // pred_fallthru
      _
    %311 = vsyncpa [#allocation4], 1
    %312 = vsyncpa [#allocation7], 1
    %313 = vsyncpa [#allocation5], 1

</llo_original>
